<compile_context>
chip_gen: v5e
topology: v5e:2x2
jax: 0.10.0
libtpu: 0.0.40
codegen_flags: <defaults>
</compile_context>

<pallas_src>
import jax
import jax.numpy as jnp
from jax.experimental import pallas as pl
from jax.experimental.pallas import tpu as pltpu

_LANE = 128
_BLOCK_BYTES = 1 << 20  # ~1 MiB per block of the flat element stream.


def _copy_kernel(x_ref, o_ref):
    # Straight element copy of the current (block_rows, 128) tile of the flat
    # row-major element stream.
    o_ref[...] = x_ref[...]


def _round_up(n, m):
    return ((n + m - 1) // m) * m


def _round_down(n, m):
    return (n // m) * m


def _sublane_multiple(dtype):
    # Minimum sublane multiple scales with sub-32-bit packing:
    # 4-byte -> 8, 2-byte -> 16, 1-byte -> 32.
    itemsize = jnp.dtype(dtype).itemsize
    return max(8, 32 // max(1, itemsize))


def _resolve_size(total, size):
    size = tuple(int(s) for s in size)
    if size.count(-1) > 1:
        raise ValueError("only one dimension can be inferred")
    if -1 in size:
        known = 1
        for s in size:
            if s != -1:
                known *= s
        if known == 0 or total % known != 0:
            raise ValueError(f"cannot view {total} elements as {size}")
        size = tuple(total // known if s == -1 else s for s in size)
    prod = 1
    for s in size:
        prod *= s
    if prod != total:
        raise ValueError(f"cannot view {total} elements as {size}")
    return size


def _pallas_copy_slab(slab):
    """Copy a lane-dense (rows, 128) slab through a Pallas kernel."""
    rows, cols = slab.shape
    dtype = slab.dtype
    itemsize = jnp.dtype(dtype).itemsize
    sub = _sublane_multiple(dtype)

    # Largest sublane-aligned block within the ~1 MiB budget; small inputs
    # get a single block covering all rows (rounded up to the sublane
    # multiple so the (8,128) constraint holds).
    max_rows = max(sub, _round_down(_BLOCK_BYTES // (cols * itemsize), sub))
    block_rows = min(max_rows, _round_up(rows, sub))
    grid = (pl.cdiv(rows, block_rows),)

    return pl.pallas_call(
        _copy_kernel,
        out_shape=jax.ShapeDtypeStruct((rows, cols), dtype),
        grid_spec=pltpu.PrefetchScalarGridSpec(
            num_scalar_prefetch=0,
            grid=grid,
            in_specs=[pl.BlockSpec((block_rows, cols), lambda i: (i, 0))],
            out_specs=pl.BlockSpec((block_rows, cols), lambda i: (i, 0)),
        ),
        compiler_params=pltpu.CompilerParams(
            dimension_semantics=("parallel",),
        ),
        cost_estimate=pl.CostEstimate(
            flops=0,
            transcendentals=0,
            bytes_accessed=2 * rows * cols * itemsize,
        ),
    )(slab)


def pallas_view(x, size):
    """Equivalent of `x.view(size)` for a contiguous tensor."""
    total = int(x.size)
    out_shape = _resolve_size(total, size)

    if total == 0 or total % _LANE != 0:
        # A view implies no data movement; when the element stream does not
        # factor into a lane-dense (rows, 128) slab, use the metadata-only
        # reshape directly (this is also the semantically exact fast path).
        return x.reshape(out_shape)

    # Flatten to the row-major element stream (metadata only, no copy).
    slab = x.reshape(total // _LANE, _LANE)
    out_slab = _pallas_copy_slab(slab)
    # Present the target shape (metadata only).
    return out_slab.reshape(out_shape)


class View:
    """JAX/Pallas counterpart of the PyTorch View module."""

    def __init__(self, size):
        self.size = size

    def __call__(self, tensor):
        return pallas_view(tensor, self.size)


if __name__ == "__main__":
    k0, k1, k2 = jax.random.split(jax.random.PRNGKey(0), 3)

    # NCHW input, as the PyTorch encoder would feed it.
    x = jax.random.normal(k0, (2, 4, 16, 16), dtype=jnp.float32)
    m = View((2, -1))
    y = jax.block_until_ready(m(x))
    expected = jnp.reshape(x, (2, 4 * 16 * 16))
    assert y.shape == (2, 1024), y.shape
    assert y.dtype == x.dtype
    assert bool(jnp.array_equal(y, expected))

    # Larger input: exercises a multi-step grid with a masked partial last
    # block (rows = 2304 -> one 2048-row block + one 256-row partial block).
    x2 = jax.random.normal(k1, (4, 8, 96, 96), dtype=jnp.float32)
    y2 = jax.block_until_ready(View((4, -1))(x2))
    assert bool(jnp.array_equal(y2, jnp.reshape(x2, (4, 8 * 96 * 96))))

    # bf16 input: exercises the dtype-aware sublane multiple (16-row packing).
    x3 = jax.random.normal(k2, (2, 4, 16, 16)).astype(jnp.bfloat16)
    y3 = jax.block_until_ready(View((-1, 256))(x3))
    assert y3.dtype == jnp.bfloat16
    assert bool(jnp.array_equal(y3, jnp.reshape(x3, (8, 256))))

    print("KERNEL_OK")
</pallas_src>

<mosaic_0001>
module attributes {stable_mosaic.version = 11 : i64} {
  func.func @_copy_kernel(%arg0: i32, %arg1: memref<16x128xf32, #tpu.memory_space<vmem>>, %arg2: memref<16x128xf32, #tpu.memory_space<vmem>>) attributes {dimension_semantics = [#tpu.dimension_semantics<parallel>], iteration_bounds = array<i64: 1>, scalar_prefetch = 0 : i64, scratch_operands = 0 : i64, tpu.core_type = #tpu.core_type<tc>, window_params = [{transform_indices = @transform_0, window_bounds = array<i64: 16, 128>}, {transform_indices = @transform_1, window_bounds = array<i64: 16, 128>}]} {
    %c0 = arith.constant 0 : index
    %c0_0 = arith.constant 0 : index
    %0 = vector.load %arg1[%c0, %c0_0] : memref<16x128xf32, #tpu.memory_space<vmem>>, vector<16x128xf32>
    %c0_1 = arith.constant 0 : index
    %c0_2 = arith.constant 0 : index
    %1 = vector.load %arg2[%c0_1, %c0_2] : memref<16x128xf32, #tpu.memory_space<vmem>>, vector<16x128xf32>
    tpu.vector_store %arg2[%c0_1, %c0_2], %0 {strides = array<i32>} : memref<16x128xf32, #tpu.memory_space<vmem>>, vector<16x128xf32>,
    return
  }
  func.func @transform_0(%arg0: i32) -> (i32, i32) {
    %c0_i32 = arith.constant 0 : i32
    %c0_i32_0 = arith.constant 0 : i32
    return %arg0, %c0_i32 : i32, i32
  }
  func.func @transform_1(%arg0: i32) -> (i32, i32) {
    %c0_i32 = arith.constant 0 : i32
    %c0_i32_0 = arith.constant 0 : i32
    return %arg0, %c0_i32 : i32, i32
  }
}

</mosaic_0001>

<llo_original>
// kernel: tpu_custom_call.1
$region0: #{tpu_custom_call.1}
  #allocation0 [shape = 'u32[]', space=smem, size = 0x4, offset = 0x4, fixed_abs, tag = 'smem constant byte address 0x4 - core index']
  #allocation1 [shape = 'u32[72,128]{1,0:T(1,128)}', space=vmem, size = 0x9000, scoped, tag = 'internal scratch']
  %s0 = inlined_call_operand.hbm [shape: f32[16,128], index: 0, kind: input, shape index: {}]
  %s1 = inlined_call_operand.hbm [shape: f32[16,128], index: 1, kind: output, shape index: {}]
  %s2 = sld [smem:[#allocation0]]
  $region18: #{tpu_custom_call.1} parent=0
    _
  %s4 = ssub.s32 1, %s2
  %s5 = scalar_select 0, %s4, %s2
  $region1: #{tpu_custom_call.1} parent=0
    #allocation2 [shape = 'u8[8192]{0}', space=vmem, size = 0x2000, scoped, tag = 'input window, operand 0, single buffered']
    #allocation3 [shape = 's32[1]{0}', space=sflag, size = 0x4, scoped, tag = 'scoped memory for tpu_custom_call.1']
    #allocation4 [shape = 's32[1]{0}', space=sflag, size = 0x4, scoped, tag = 'scoped memory for tpu_custom_call.1']
    #allocation5 [shape = 'u8[8192]{0}', space=vmem, size = 0x2000, scoped, tag = 'output window, operand 0, single buffered']
    %6 = vsyncpa [#allocation3], 0
    %7 = vsyncpa [#allocation4], 0
    // Predicated region
    $region2: #{tpu_custom_call.1} parent=1 // pred_check
      _
    $region3: #{tpu_custom_call.1} parent=1 // pred_check_branch
      %9 = sbr.rel (0) target = $region5
    $region4: #{tpu_custom_call.1} parent=1 // pred_region
      %11 = vsyncadd [#allocation3], 0
      %s12 = sshll.u32 %s0, 4
      %s13 = int_to_ptr.hbm [resolvable:$true] %s12
      %s14 = sshll.u32 [#allocation2], 4
      %s15 = int_to_ptr.vmem [resolvable:$true] %s14
      %20 = dma.hbm_to_vmem [thread:$0]  %s13, 256, %s15, [#allocation3], 128, 128, 8
    $region5: #{tpu_custom_call.1} parent=1 // pred_fallthru
      _
    // Predicated region
    $region6: #{tpu_custom_call.1} parent=1 // pred_check
      _
    $region7: #{tpu_custom_call.1} parent=1 // pred_check_branch
      %22 = sbr.rel (0) target = $region9
    $region8: #{tpu_custom_call.1} parent=1 // pred_region
      %24 = dma.done [#allocation3], 256
    $region9: #{tpu_custom_call.1} parent=1 // pred_fallthru
      _
    %v25 = vld [vmem:[#allocation2] sm:$0xff]
    %v26 = vld [vmem:[#allocation2 + $0x8] sm:$0xff]
    %27 = vst [vmem:[#allocation5] sm:$0xff] %v25
    %28 = vst [vmem:[#allocation5 + $0x8] sm:$0xff] %v26
    // Predicated region
    $region10: #{tpu_custom_call.1} parent=1 // pred_check
      _
    $region11: #{tpu_custom_call.1} parent=1 // pred_check_branch
      %30 = sbr.rel (0) target = $region13
    $region12: #{tpu_custom_call.1} parent=1 // pred_region
      %32 = vsyncadd [#allocation4], 0
      %s33 = sshll.u32 [#allocation5], 4
      %s34 = int_to_ptr.vmem [resolvable:$true] %s33
      %s35 = sshll.u32 %s1, 4
      %s36 = int_to_ptr.hbm [resolvable:$true] %s35
      %41 = dma.vmem_to_hbm [thread:$0]  %s34, 256, %s36, [#allocation4], 128, 128, 8
    $region13: #{tpu_custom_call.1} parent=1 // pred_fallthru
      _
    // Predicated region
    $region14: #{tpu_custom_call.1} parent=1 // pred_check
      _
    $region15: #{tpu_custom_call.1} parent=1 // pred_check_branch
      %43 = sbr.rel (0) target = $region17
    $region16: #{tpu_custom_call.1} parent=1 // pred_region
      %45 = dma.done [#allocation4], 256
    $region17: #{tpu_custom_call.1} parent=1 // pred_fallthru
      _
    %46 = vsyncpa [#allocation3], 1
    %47 = vsyncpa [#allocation4], 1

</llo_original>
